<compile_context>
chip_gen: v7x
topology: tpu7x:2x2x1
jax: 0.10.0
libtpu: 0.0.40
codegen_flags: <defaults>
</compile_context>

<pallas_src>
import functools

import jax
import jax.numpy as jnp
from jax import lax
from jax.experimental import pallas as pl
from jax.experimental.pallas import tpu as pltpu

EPS = 1e-5          # nn.InstanceNorm2d default
NEG_SLOPE = 0.01    # LeakyReLU slope used by the module


def _conv_in_lrelu_kernel(x_ref, w_ref, m_ref, o_ref, *,
                          kh, kw, wpe, l_ext, inv_count):
    # x_ref: (Cin, Lp)        flattened zero-padded input for one batch element (bf16/f32)
    # w_ref: (KH*KW, Cout, Cin) conv taps (bf16/f32), VMEM-resident across the grid
    # m_ref: (1, L)           f32 {0,1} mask of valid output columns (x < W_out)
    # o_ref: (Cout, L)        extended output rows (L = H_out * Wp), lane-dense
    xv = x_ref[...]
    mask = m_ref[...]

    # Conv2d (no bias) as a sum of flat-shifted MXU matmuls, accumulated in f32.
    acc = None
    for i in range(kh):
        for j in range(kw):
            s = i * wpe + j                       # flat shift of this tap
            xs = xv[:, s:s + l_ext]               # (Cin, L)
            wt = w_ref[i * kw + j]                # (Cout, Cin)
            part = jnp.dot(wt, xs, preferred_element_type=jnp.float32)
            acc = part if acc is None else acc + part

    # InstanceNorm2d (affine=False): single-pass masked sum / sum-of-squares over spatial axis.
    ym = acc * mask                               # zero the padded "garbage" columns
    s1 = jnp.sum(ym, axis=1, keepdims=True)       # (Cout, 1)  lane (last-axis) reduction
    s2 = jnp.sum(ym * ym, axis=1, keepdims=True)  # (Cout, 1)
    mean = s1 * inv_count
    var = jnp.maximum(s2 * inv_count - mean * mean, 0.0)   # biased variance
    y = (acc - mean) * lax.rsqrt(var + EPS)

    # LeakyReLU(0.01)
    y = jnp.where(y > 0, y, NEG_SLOPE * y)

    o_ref[...] = y.astype(o_ref.dtype)


def basic_conv_in(x, weight, *, padding=1, mxu_dtype=jnp.bfloat16):
    """x: (N, Cin, H, W) f32, weight: (Cout, Cin, KH, KW) f32 -> (N, Cout, H_out, W_out) f32.

    Stride-1 Conv2d (no bias) + InstanceNorm2d + LeakyReLU(0.01), fully fused in one kernel.
    """
    n, cin, h, w = x.shape
    cout, cin_w, kh, kw = weight.shape
    assert cin_w == cin, "channel mismatch"

    pad = padding
    hp, wpe = h + 2 * pad, w + 2 * pad            # padded spatial extents
    h_out, w_out = hp - kh + 1, wpe - kw + 1      # stride-1 output extents
    l_ext = h_out * wpe                           # extended output length (padded-width rows)
    lp = hp * wpe + (kw - 1)                      # flat input length + tail so all shifts in-bounds

    # Zero-pad and flatten the spatial dims; cast MXU operands (feedback: bf16 on v5e/v6e/v7x).
    xp = jnp.pad(x, ((0, 0), (0, 0), (pad, pad), (pad, pad)))
    xpf = jnp.pad(xp.reshape(n, cin, hp * wpe), ((0, 0), (0, 0), (0, kw - 1)))
    xpf = xpf.astype(mxu_dtype)                                  # (N, Cin, Lp)

    # Weight as per-tap (Cout, Cin) matrices: tap t = i*KW + j -> weight[:, :, i, j].
    w_taps = jnp.transpose(weight, (2, 3, 0, 1)).reshape(kh * kw, cout, cin).astype(mxu_dtype)

    # Mask of valid output columns in the extended (padded-width) rows.
    cols = jnp.arange(l_ext, dtype=jnp.int32) % wpe
    mask = (cols < w_out).astype(jnp.float32).reshape(1, l_ext)  # (1, L)

    kernel = functools.partial(
        _conv_in_lrelu_kernel,
        kh=kh, kw=kw, wpe=wpe, l_ext=l_ext,
        inv_count=1.0 / float(h_out * w_out))

    out_ext = pl.pallas_call(
        kernel,
        out_shape=jax.ShapeDtypeStruct((n, cout, l_ext), jnp.float32),
        grid_spec=pltpu.PrefetchScalarGridSpec(
            num_scalar_prefetch=0,
            grid=(n,),
            in_specs=[
                # Batch dim squeezed out -> 2-D kernel refs.
                pl.BlockSpec((None, cin, lp), lambda b: (b, 0, 0)),
                # Constant index maps: weight taps + mask stay resident in VMEM.
                pl.BlockSpec((kh * kw, cout, cin), lambda b: (0, 0, 0)),
                pl.BlockSpec((1, l_ext), lambda b: (0, 0)),
            ],
            out_specs=pl.BlockSpec((None, cout, l_ext), lambda b: (b, 0, 0)),
        ),
        compiler_params=pltpu.CompilerParams(
            dimension_semantics=("parallel",)),   # shards batch across TCs on v7x
    )(xpf, w_taps, mask)

    # (N, Cout, H_out*Wp) -> (N, Cout, H_out, Wp) -> strip padded columns (no transpose needed).
    return out_ext.reshape(n, cout, h_out, wpe)[:, :, :, :w_out]


def _reference(x, weight, padding):
    """Pure-JAX f32 reference: conv (no bias) -> InstanceNorm2d -> LeakyReLU(0.01)."""
    y = lax.conv_general_dilated(
        x, weight, window_strides=(1, 1),
        padding=[(padding, padding), (padding, padding)],
        dimension_numbers=("NCHW", "OIHW", "NCHW"))
    mean = jnp.mean(y, axis=(2, 3), keepdims=True)
    var = jnp.mean((y - mean) ** 2, axis=(2, 3), keepdims=True)
    y = (y - mean) * lax.rsqrt(var + EPS)
    return jnp.where(y > 0, y, NEG_SLOPE * y)


if __name__ == "__main__":
    key = jax.random.PRNGKey(0)
    k1, k2 = jax.random.split(key)

    N, CIN, H, W = 2, 4, 16, 16
    COUT, KH, KW = 8, 3, 3

    x = jax.random.normal(k1, (N, CIN, H, W), dtype=jnp.float32)
    fan_in = CIN * KH * KW
    weight = jax.random.normal(k2, (COUT, CIN, KH, KW), dtype=jnp.float32) * (2.0 / fan_in) ** 0.5

    y = basic_conv_in(x, weight, padding=1)
    jax.block_until_ready(y)
    assert y.shape == (N, COUT, H, W)

    # Loose-tolerance sanity check vs f32 reference (kernel uses bf16 MXU operands).
    y_ref = _reference(x, weight, 1)
    max_err = float(jnp.max(jnp.abs(y - y_ref)))
    assert max_err < 0.1, f"max abs error vs reference too large: {max_err}"

    print("KERNEL_OK")
</pallas_src>

<mosaic_0001>
module attributes {stable_mosaic.version = 11 : i64} {
  func.func @_conv_in_lrelu_kernel(%arg0: i32, %arg1: memref<1x4x326xbf16, #tpu.memory_space<vmem>>, %arg2: memref<9x8x4xbf16, #tpu.memory_space<vmem>>, %arg3: memref<1x288xf32, #tpu.memory_space<vmem>>, %arg4: memref<1x8x288xf32, #tpu.memory_space<vmem>>) attributes {dimension_semantics = [#tpu.dimension_semantics<parallel>], iteration_bounds = array<i64: 2>, scalar_prefetch = 0 : i64, scratch_operands = 0 : i64, tpu.core_type = #tpu.core_type<tc>, window_params = [{transform_indices = @transform_0, window_bounds = array<i64: 1, 4, 326>}, {pipeline_mode = #tpu.pipeline_mode<synchronous>, transform_indices = @transform_1, window_bounds = array<i64: 9, 8, 4>}, {pipeline_mode = #tpu.pipeline_mode<synchronous>, transform_indices = @transform_2, window_bounds = array<i64: 1, 288>}, {transform_indices = @transform_3, window_bounds = array<i64: 1, 8, 288>}]} {
    %c0 = arith.constant 0 : index
    %c0_0 = arith.constant 0 : index
    %c0_1 = arith.constant 0 : index
    %0 = vector.load %arg1[%c0, %c0_0, %c0_1] : memref<1x4x326xbf16, #tpu.memory_space<vmem>>, vector<1x4x326xbf16>
    %1 = vector.shape_cast %0 : vector<1x4x326xbf16> to vector<4x326xbf16>
    %c0_2 = arith.constant 0 : index
    %c0_3 = arith.constant 0 : index
    %2 = vector.load %arg3[%c0_2, %c0_3] : memref<1x288xf32, #tpu.memory_space<vmem>>, vector<1x288xf32>
    %3 = vector.extract_strided_slice %1 {offsets = [0, 0], sizes = [4, 288], strides = [1, 1]} : vector<4x326xbf16> to vector<4x288xbf16>
    %c0_4 = arith.constant 0 : index
    %c0_5 = arith.constant 0 : index
    %c0_6 = arith.constant 0 : index
    %4 = vector.load %arg2[%c0_4, %c0_5, %c0_6] : memref<9x8x4xbf16, #tpu.memory_space<vmem>>, vector<1x8x4xbf16>
    %5 = vector.shape_cast %4 : vector<1x8x4xbf16> to vector<8x4xbf16>
    %cst = arith.constant dense<0.000000e+00> : vector<8x288xf32>
    %6 = tpu.matmul %5, %3, %cst {dimension_numbers = #tpu.dot_dimension_numbers<[1], [0], [0], [1], [0, 0, 1, 1], [], []>} : vector<8x4xbf16>, vector<4x288xbf16>, vector<8x288xf32> -> vector<8x288xf32>
    %7 = vector.extract_strided_slice %1 {offsets = [0, 1], sizes = [4, 288], strides = [1, 1]} : vector<4x326xbf16> to vector<4x288xbf16>
    %c1 = arith.constant 1 : index
    %c0_7 = arith.constant 0 : index
    %c0_8 = arith.constant 0 : index
    %8 = vector.load %arg2[%c1, %c0_7, %c0_8] : memref<9x8x4xbf16, #tpu.memory_space<vmem>>, vector<1x8x4xbf16>
    %9 = vector.shape_cast %8 : vector<1x8x4xbf16> to vector<8x4xbf16>
    %cst_9 = arith.constant dense<0.000000e+00> : vector<8x288xf32>
    %10 = tpu.matmul %9, %7, %cst_9 {dimension_numbers = #tpu.dot_dimension_numbers<[1], [0], [0], [1], [0, 0, 1, 1], [], []>} : vector<8x4xbf16>, vector<4x288xbf16>, vector<8x288xf32> -> vector<8x288xf32>
    %11 = arith.addf %6, %10 : vector<8x288xf32>
    %12 = vector.extract_strided_slice %1 {offsets = [0, 2], sizes = [4, 288], strides = [1, 1]} : vector<4x326xbf16> to vector<4x288xbf16>
    %c2 = arith.constant 2 : index
    %c0_10 = arith.constant 0 : index
    %c0_11 = arith.constant 0 : index
    %13 = vector.load %arg2[%c2, %c0_10, %c0_11] : memref<9x8x4xbf16, #tpu.memory_space<vmem>>, vector<1x8x4xbf16>
    %14 = vector.shape_cast %13 : vector<1x8x4xbf16> to vector<8x4xbf16>
    %cst_12 = arith.constant dense<0.000000e+00> : vector<8x288xf32>
    %15 = tpu.matmul %14, %12, %cst_12 {dimension_numbers = #tpu.dot_dimension_numbers<[1], [0], [0], [1], [0, 0, 1, 1], [], []>} : vector<8x4xbf16>, vector<4x288xbf16>, vector<8x288xf32> -> vector<8x288xf32>
    %16 = arith.addf %11, %15 : vector<8x288xf32>
    %17 = vector.extract_strided_slice %1 {offsets = [0, 18], sizes = [4, 288], strides = [1, 1]} : vector<4x326xbf16> to vector<4x288xbf16>
    %c3 = arith.constant 3 : index
    %c0_13 = arith.constant 0 : index
    %c0_14 = arith.constant 0 : index
    %18 = vector.load %arg2[%c3, %c0_13, %c0_14] : memref<9x8x4xbf16, #tpu.memory_space<vmem>>, vector<1x8x4xbf16>
    %19 = vector.shape_cast %18 : vector<1x8x4xbf16> to vector<8x4xbf16>
    %cst_15 = arith.constant dense<0.000000e+00> : vector<8x288xf32>
    %20 = tpu.matmul %19, %17, %cst_15 {dimension_numbers = #tpu.dot_dimension_numbers<[1], [0], [0], [1], [0, 0, 1, 1], [], []>} : vector<8x4xbf16>, vector<4x288xbf16>, vector<8x288xf32> -> vector<8x288xf32>
    %21 = arith.addf %16, %20 : vector<8x288xf32>
    %22 = vector.extract_strided_slice %1 {offsets = [0, 19], sizes = [4, 288], strides = [1, 1]} : vector<4x326xbf16> to vector<4x288xbf16>
    %c4 = arith.constant 4 : index
    %c0_16 = arith.constant 0 : index
    %c0_17 = arith.constant 0 : index
    %23 = vector.load %arg2[%c4, %c0_16, %c0_17] : memref<9x8x4xbf16, #tpu.memory_space<vmem>>, vector<1x8x4xbf16>
    %24 = vector.shape_cast %23 : vector<1x8x4xbf16> to vector<8x4xbf16>
    %cst_18 = arith.constant dense<0.000000e+00> : vector<8x288xf32>
    %25 = tpu.matmul %24, %22, %cst_18 {dimension_numbers = #tpu.dot_dimension_numbers<[1], [0], [0], [1], [0, 0, 1, 1], [], []>} : vector<8x4xbf16>, vector<4x288xbf16>, vector<8x288xf32> -> vector<8x288xf32>
    %26 = arith.addf %21, %25 : vector<8x288xf32>
    %27 = vector.extract_strided_slice %1 {offsets = [0, 20], sizes = [4, 288], strides = [1, 1]} : vector<4x326xbf16> to vector<4x288xbf16>
    %c5 = arith.constant 5 : index
    %c0_19 = arith.constant 0 : index
    %c0_20 = arith.constant 0 : index
    %28 = vector.load %arg2[%c5, %c0_19, %c0_20] : memref<9x8x4xbf16, #tpu.memory_space<vmem>>, vector<1x8x4xbf16>
    %29 = vector.shape_cast %28 : vector<1x8x4xbf16> to vector<8x4xbf16>
    %cst_21 = arith.constant dense<0.000000e+00> : vector<8x288xf32>
    %30 = tpu.matmul %29, %27, %cst_21 {dimension_numbers = #tpu.dot_dimension_numbers<[1], [0], [0], [1], [0, 0, 1, 1], [], []>} : vector<8x4xbf16>, vector<4x288xbf16>, vector<8x288xf32> -> vector<8x288xf32>
    %31 = arith.addf %26, %30 : vector<8x288xf32>
    %32 = vector.extract_strided_slice %1 {offsets = [0, 36], sizes = [4, 288], strides = [1, 1]} : vector<4x326xbf16> to vector<4x288xbf16>
    %c6 = arith.constant 6 : index
    %c0_22 = arith.constant 0 : index
    %c0_23 = arith.constant 0 : index
    %33 = vector.load %arg2[%c6, %c0_22, %c0_23] : memref<9x8x4xbf16, #tpu.memory_space<vmem>>, vector<1x8x4xbf16>
    %34 = vector.shape_cast %33 : vector<1x8x4xbf16> to vector<8x4xbf16>
    %cst_24 = arith.constant dense<0.000000e+00> : vector<8x288xf32>
    %35 = tpu.matmul %34, %32, %cst_24 {dimension_numbers = #tpu.dot_dimension_numbers<[1], [0], [0], [1], [0, 0, 1, 1], [], []>} : vector<8x4xbf16>, vector<4x288xbf16>, vector<8x288xf32> -> vector<8x288xf32>
    %36 = arith.addf %31, %35 : vector<8x288xf32>
    %37 = vector.extract_strided_slice %1 {offsets = [0, 37], sizes = [4, 288], strides = [1, 1]} : vector<4x326xbf16> to vector<4x288xbf16>
    %c7 = arith.constant 7 : index
    %c0_25 = arith.constant 0 : index
    %c0_26 = arith.constant 0 : index
    %38 = vector.load %arg2[%c7, %c0_25, %c0_26] : memref<9x8x4xbf16, #tpu.memory_space<vmem>>, vector<1x8x4xbf16>
    %39 = vector.shape_cast %38 : vector<1x8x4xbf16> to vector<8x4xbf16>
    %cst_27 = arith.constant dense<0.000000e+00> : vector<8x288xf32>
    %40 = tpu.matmul %39, %37, %cst_27 {dimension_numbers = #tpu.dot_dimension_numbers<[1], [0], [0], [1], [0, 0, 1, 1], [], []>} : vector<8x4xbf16>, vector<4x288xbf16>, vector<8x288xf32> -> vector<8x288xf32>
    %41 = arith.addf %36, %40 : vector<8x288xf32>
    %42 = vector.extract_strided_slice %1 {offsets = [0, 38], sizes = [4, 288], strides = [1, 1]} : vector<4x326xbf16> to vector<4x288xbf16>
    %c8 = arith.constant 8 : index
    %c0_28 = arith.constant 0 : index
    %c0_29 = arith.constant 0 : index
    %43 = vector.load %arg2[%c8, %c0_28, %c0_29] : memref<9x8x4xbf16, #tpu.memory_space<vmem>>, vector<1x8x4xbf16>
    %44 = vector.shape_cast %43 : vector<1x8x4xbf16> to vector<8x4xbf16>
    %cst_30 = arith.constant dense<0.000000e+00> : vector<8x288xf32>
    %45 = tpu.matmul %44, %42, %cst_30 {dimension_numbers = #tpu.dot_dimension_numbers<[1], [0], [0], [1], [0, 0, 1, 1], [], []>} : vector<8x4xbf16>, vector<4x288xbf16>, vector<8x288xf32> -> vector<8x288xf32>
    %46 = arith.addf %41, %45 : vector<8x288xf32>
    %47 = vector.broadcast %2 : vector<1x288xf32> to vector<8x288xf32>
    %48 = arith.mulf %46, %47 : vector<8x288xf32>
    %cst_31 = arith.constant dense<0.000000e+00> : vector<8xf32>
    %49 = vector.multi_reduction <add>, %48, %cst_31 [1] : vector<8x288xf32> to vector<8xf32>
    %50 = vector.shape_cast %49 : vector<8xf32> to vector<8x1xf32>
    %51 = arith.mulf %48, %48 : vector<8x288xf32>
    %cst_32 = arith.constant dense<0.000000e+00> : vector<8xf32>
    %52 = vector.multi_reduction <add>, %51, %cst_32 [1] : vector<8x288xf32> to vector<8xf32>
    %53 = vector.shape_cast %52 : vector<8xf32> to vector<8x1xf32>
    %cst_33 = arith.constant 3.906250e-03 : f32
    %54 = vector.broadcast %cst_33 : f32 to vector<8x1xf32>
    %55 = arith.mulf %50, %54 : vector<8x1xf32>
    %cst_34 = arith.constant 3.906250e-03 : f32
    %56 = vector.broadcast %cst_34 : f32 to vector<8x1xf32>
    %57 = arith.mulf %53, %56 : vector<8x1xf32>
    %58 = arith.mulf %55, %55 : vector<8x1xf32>
    %59 = arith.subf %57, %58 : vector<8x1xf32>
    %cst_35 = arith.constant 0.000000e+00 : f32
    %60 = vector.broadcast %cst_35 : f32 to vector<8x1xf32>
    %61 = arith.maximumf %59, %60 : vector<8x1xf32>
    %62 = vector.broadcast %55 : vector<8x1xf32> to vector<8x288xf32>
    %63 = arith.subf %46, %62 : vector<8x288xf32>
    %cst_36 = arith.constant 9.99999974E-6 : f32
    %64 = vector.broadcast %cst_36 : f32 to vector<8x1xf32>
    %65 = arith.addf %61, %64 : vector<8x1xf32>
    %66 = math.rsqrt %65 : vector<8x1xf32>
    %67 = vector.broadcast %66 : vector<8x1xf32> to vector<8x288xf32>
    %68 = arith.mulf %63, %67 : vector<8x288xf32>
    %cst_37 = arith.constant 0.000000e+00 : f32
    %69 = vector.broadcast %cst_37 : f32 to vector<8x288xf32>
    %70 = arith.cmpf ogt, %68, %69 : vector<8x288xf32>
    %cst_38 = arith.constant 0.00999999977 : f32
    %71 = vector.broadcast %cst_38 : f32 to vector<8x288xf32>
    %72 = arith.mulf %71, %68 : vector<8x288xf32>
    %73 = arith.select %70, %68, %72 : vector<8x288xi1>, vector<8x288xf32>
    %c0_39 = arith.constant 0 : index
    %c0_40 = arith.constant 0 : index
    %c0_41 = arith.constant 0 : index
    %74 = vector.load %arg4[%c0_39, %c0_40, %c0_41] : memref<1x8x288xf32, #tpu.memory_space<vmem>>, vector<1x8x288xf32>
    %75 = vector.shape_cast %74 : vector<1x8x288xf32> to vector<8x288xf32>
    %76 = vector.shape_cast %73 : vector<8x288xf32> to vector<1x8x288xf32>
    tpu.vector_store %arg4[%c0_39, %c0_40, %c0_41], %76 {strides = array<i32>} : memref<1x8x288xf32, #tpu.memory_space<vmem>>, vector<1x8x288xf32>,
    return
  }
  func.func @transform_0(%arg0: i32) -> (i32, i32, i32) {
    %c0_i32 = arith.constant 0 : i32
    %c0_i32_0 = arith.constant 0 : i32
    %c0_i32_1 = arith.constant 0 : i32
    return %arg0, %c0_i32, %c0_i32_0 : i32, i32, i32
  }
  func.func @transform_1(%arg0: i32) -> (i32, i32, i32) {
    %c0_i32 = arith.constant 0 : i32
    %c0_i32_0 = arith.constant 0 : i32
    %c0_i32_1 = arith.constant 0 : i32
    %c0_i32_2 = arith.constant 0 : i32
    return %c0_i32, %c0_i32_0, %c0_i32_1 : i32, i32, i32
  }
  func.func @transform_2(%arg0: i32) -> (i32, i32) {
    %c0_i32 = arith.constant 0 : i32
    %c0_i32_0 = arith.constant 0 : i32
    %c0_i32_1 = arith.constant 0 : i32
    return %c0_i32, %c0_i32_0 : i32, i32
  }
  func.func @transform_3(%arg0: i32) -> (i32, i32, i32) {
    %c0_i32 = arith.constant 0 : i32
    %c0_i32_0 = arith.constant 0 : i32
    %c0_i32_1 = arith.constant 0 : i32
    return %arg0, %c0_i32, %c0_i32_0 : i32, i32, i32
  }
}

</mosaic_0001>

<llo_original>
// kernel: tpu_custom_call.1
$region0: #{tpu_custom_call.1}
  #allocation0 [shape = 'u32[]', space=smem, size = 0x4, offset = 0x4, fixed_abs, tag = 'smem constant byte address 0x4 - core index']
  #allocation1 [shape = 'u32[144,128]{1,0:T(1,128)}', space=vmem, size = 0x12000, scoped, tag = 'internal scratch']
  %s0 = inlined_call_operand.vmem [shape: bf16[2,4,326], index: 0, kind: input, shape index: {}]
  %s1 = inlined_call_operand.vmem [shape: bf16[9,8,4], index: 1, kind: input, shape index: {}]
  %s2 = inlined_call_operand.vmem [shape: f32[1,288], index: 2, kind: input, shape index: {}]
  %s3 = inlined_call_operand.hbm [shape: f32[2,8,288], index: 3, kind: output, shape index: {}]
  %s4 = sld [smem:[#allocation0]]
  $region45: #{tpu_custom_call.1} parent=0
    _
  %s6 = ssub.s32 1, %s4
  %s7 = scalar_select 0, %s6, %s4
  $region1: #{tpu_custom_call.1} parent=0
    #allocation2 [shape = 'u8[24576]{0}', space=vmem, size = 0x6000, scoped, tag = 'output window, operand 0']
    #allocation3 [shape = 's32[2]{0}', space=sflag, size = 0x8, scoped, tag = 'scoped memory for tpu_custom_call.1']
    %8 = vsyncpa [#allocation3], 0
    %s9 = scalar_lea.sflag [#allocation3], 1
    %10 = vsyncpa %s9, 0
    loop: start=0, step=1, limit=4
    $region2: #{tpu_custom_call.1} parent=1 // loop_pre_header
      _
    $region3: #{tpu_custom_call.1} parent=1 // loop_header
      %s12 = sphi 0, %s16
      %p13 = scmp.ge.s32.totalorder %s12, 4
      %s22 = sphi 0, %s24
      %s25 = sphi 0, %s22
      %s26 = sphi 0, %s25
      %s42 = sphi 0, %s26
      %s46 = sphi 0, %s46
      %s48 = sphi 0, %s46
      %s49 = sphi 0, %s48
      %s63 = sphi 0, %s49
      %s67 = sphi 0, %s67
      %s69 = sphi 0, %s67
      %s70 = sphi 0, %s69
      %s84 = sphi 0, %s70
      %s90 = sphi 0, %s92
      %s93 = sphi 0, %s90
      %s94 = sphi 0, %s93
      %s110 = sphi 0, %s94
    $region4: #{tpu_custom_call.1} parent=1 // loop_header_branch
      %15 = sbr.rel (%p13) target = $region8
    $region5: #{tpu_custom_call.1} parent=1 // loop_body
      %s17 = ssub.s32 %s12, 1
      %s18 = ssub.s32 %s12, 2
      %s19 = sadd.s32 %s12, 1
      %s20 = ssub.s32 %s12, %s19
      %p21 = scmp.eq.s32.totalorder %s20, 0
      %s23 = sadd.s32 %s22, 1
      %s24 = scalar_select %p21, %s22, %s23
      %p27 = pneg %p21
      %p28 = scmp.eq.s32.totalorder %s12, 1
      %p29 = por %p27, %p28
      %p30 = scmp.ne.s32.totalorder %s22, %s25
      %p31 = scmp.eq.s32.totalorder %s12, 0
      %p32 = por %p30, %p31
      %p33 = scmp.ne.s32.totalorder %s22, %s25
      %p34 = scmp.eq.s32.totalorder %s17, 1
      %p35 = por %p33, %p34
      %p36 = scmp.ne.s32.totalorder %s25, %s26
      %p37 = scmp.eq.s32.totalorder %s17, 0
      %p38 = por %p36, %p37
      %p39 = scmp.ne.s32.totalorder %s25, %s26
      %p40 = scmp.eq.s32.totalorder %s18, 1
      %p41 = por %p39, %p40
      %p43 = scmp.ne.s32.totalorder %s26, %s42
      %p44 = scmp.eq.s32.totalorder %s18, 0
      %p45 = por %p43, %p44
      %s47 = sadd.s32 %s46, 1
      %p50 = scmp.eq.s32.totalorder %s12, 1
      %p51 = scmp.ne.s32.totalorder %s46, %s48
      %p52 = scmp.eq.s32.totalorder %s12, 0
      %p53 = por %p51, %p52
      %p54 = scmp.ne.s32.totalorder %s46, %s48
      %p55 = scmp.eq.s32.totalorder %s17, 1
      %p56 = por %p54, %p55
      %p57 = scmp.ne.s32.totalorder %s48, %s49
      %p58 = scmp.eq.s32.totalorder %s17, 0
      %p59 = por %p57, %p58
      %p60 = scmp.ne.s32.totalorder %s48, %s49
      %p61 = scmp.eq.s32.totalorder %s18, 1
      %p62 = por %p60, %p61
      %p64 = scmp.ne.s32.totalorder %s49, %s63
      %p65 = scmp.eq.s32.totalorder %s18, 0
      %p66 = por %p64, %p65
      %s68 = sadd.s32 %s67, 1
      %p71 = scmp.eq.s32.totalorder %s12, 1
      %p72 = scmp.ne.s32.totalorder %s67, %s69
      %p73 = scmp.eq.s32.totalorder %s12, 0
      %p74 = por %p72, %p73
      %p75 = scmp.ne.s32.totalorder %s67, %s69
      %p76 = scmp.eq.s32.totalorder %s17, 1
      %p77 = por %p75, %p76
      %p78 = scmp.ne.s32.totalorder %s69, %s70
      %p79 = scmp.eq.s32.totalorder %s17, 0
      %p80 = por %p78, %p79
      %p81 = scmp.ne.s32.totalorder %s69, %s70
      %p82 = scmp.eq.s32.totalorder %s18, 1
      %p83 = por %p81, %p82
      %p85 = scmp.ne.s32.totalorder %s70, %s84
      %p86 = scmp.eq.s32.totalorder %s18, 0
      %p87 = por %p85, %p86
      %s88 = ssub.s32 %s12, %s19
      %p89 = scmp.eq.s32.totalorder %s88, 0
      %s91 = sadd.s32 %s90, 1
      %s92 = scalar_select %p89, %s90, %s91
      %p95 = pneg %p89
      %p96 = scmp.eq.s32.totalorder %s12, 1
      %p97 = por %p95, %p96
      %p98 = scmp.ne.s32.totalorder %s90, %s93
      %p99 = scmp.eq.s32.totalorder %s12, 0
      %p100 = por %p98, %p99
      %p101 = scmp.ne.s32.totalorder %s90, %s93
      %p102 = scmp.eq.s32.totalorder %s17, 1
      %p103 = por %p101, %p102
      %p104 = scmp.ne.s32.totalorder %s93, %s94
      %p105 = scmp.eq.s32.totalorder %s17, 0
      %p106 = por %p104, %p105
      %p107 = scmp.ne.s32.totalorder %s93, %s94
      %p108 = scmp.eq.s32.totalorder %s18, 1
      %p109 = por %p107, %p108
      %p111 = scmp.ne.s32.totalorder %s94, %s110
      %p112 = scmp.eq.s32.totalorder %s18, 0
      %p113 = por %p111, %p112
      %p114 = scmp.le.s32.totalorder 1, %s12
      %p115 = scmp.lt.s32.totalorder %s12, 3
      %p116 = pnand %p114, %p115
      %p117 = pneg %p116
      // Predicated region
      $region9: #{tpu_custom_call.1} parent=5 // pred_check
        _
      $region10: #{tpu_custom_call.1} parent=5 // pred_check_branch
        %119 = sbr.rel (%p116) target = $region12
      $region11: #{tpu_custom_call.1} parent=5 // pred_region
        %s120 = ssub.s32 %s12, 1
        // Predicated region
        $region13: #{tpu_custom_call.1} parent=11 // pred_check
          %p121 = pneg %p59
        $region14: #{tpu_custom_call.1} parent=11 // pred_check_branch
          %123 = sbr.rel (%p121) target = $region16
        $region15: #{tpu_custom_call.1} parent=11 // pred_region
          _
        $region16: #{tpu_custom_call.1} parent=11 // pred_fallthru
          _
        // Predicated region
        $region17: #{tpu_custom_call.1} parent=11 // pred_check
          %p124 = pneg %p80
        $region18: #{tpu_custom_call.1} parent=11 // pred_check_branch
          %126 = sbr.rel (%p124) target = $region20
        $region19: #{tpu_custom_call.1} parent=11 // pred_region
          _
        $region20: #{tpu_custom_call.1} parent=11 // pred_fallthru
          _
      $region12: #{tpu_custom_call.1} parent=5 // pred_fallthru
        _
      %p127 = scmp.lt.s32.totalorder %s12, 2
      // Predicated region
      $region21: #{tpu_custom_call.1} parent=5 // pred_check
        %p128 = pneg %p127
      $region22: #{tpu_custom_call.1} parent=5 // pred_check_branch
        %130 = sbr.rel (%p128) target = $region24
      $region23: #{tpu_custom_call.1} parent=5 // pred_region
        // Predicated region
        $region25: #{tpu_custom_call.1} parent=23 // pred_check
          %p131 = pneg %p32
        $region26: #{tpu_custom_call.1} parent=23 // pred_check_branch
          %133 = sbr.rel (%p131) target = $region28
        $region27: #{tpu_custom_call.1} parent=23 // pred_region
          %p134 = scmp.lt.s32.totalorder %s12, 1
          %s135 = scalar_select %p134, %s12, 1
          %s136 = smul.addr %s135, 3
          %s137 = smul.addr %s136, 2
          %s138 = scalar_lea.vmem %s0, %s137
        $region28: #{tpu_custom_call.1} parent=23 // pred_fallthru
          _
      $region24: #{tpu_custom_call.1} parent=5 // pred_fallthru
        _
      %p139 = scmp.le.s32.totalorder 1, %s12
      %p140 = scmp.lt.s32.totalorder %s12, 3
      %p141 = pnand %p139, %p140
      %p142 = pneg %p141
      // Predicated region
      $region29: #{tpu_custom_call.1} parent=5 // pred_check
        _
      $region30: #{tpu_custom_call.1} parent=5 // pred_check_branch
        %144 = sbr.rel (%p141) target = $region32
      $region31: #{tpu_custom_call.1} parent=5 // pred_region
        %s145 = ssub.s32 %s12, 1
        %p146 = scmp.lt.s32.totalorder %s17, 1
        %s147 = scalar_select %p146, %s17, 1
        %s148 = smul.addr %s147, 3
        %s149 = smul.addr %s148, 2
        %s150 = scalar_lea.vmem %s0, %s149
        %p151 = pneg %p38
        %p152 = pneg %p35
        %p153 = pneg %p59
        %p154 = pneg %p56
        %p155 = pneg %p80
        %p156 = pneg %p77
        %p157 = pneg %p106
        %p158 = pneg %p103
        %s159 = sand.u32 %s93, 1
        %s160 = scalar_lea.sflag [#allocation3], %s159
        %s161 = sand.u32 %s93, 1
        %s162 = smul.addr %s161, 24
        %s163 = scalar_lea.vmem [#allocation2], %s162
        %p164 = scmp.lt.s32.totalorder %s17, 1
        %s165 = scalar_select %p164, %s17, 1
        %s166 = smul.addr %s165, 3
        %s167 = smul.addr %s166, 2
        %s168 = scalar_lea.vmem %s0, %s167
        %v170 = vld [vmem:[%s168] sm:$0x3f]
        %v171 = vld [vmem:[%s2] sm:$0x7]
        %v172 = vld [vmem:[%s1] sm:$0xf]
        %s173 = scalar_lea.vmem %s1, 4
        %v174 = vld [vmem:[%s173] sm:$0xf]
        %v176 = vcombine.high %v170, %v170
        %v178 = vunpack.c.l.s4 1983009808
        %v179 = vunpack.c.0.s8 %v178
        %v180 = vlaneseq
        %v181 = vshrl.u32 %v180, 7
        %v182 = vsub.s32 %v179, %v181
        %v183 = vrot.slane %v170, %v182
        %v185 = vunpack.c.l.s4 1983009808
        %v186 = vunpack.c.0.s8 %v185
        %v187 = vlaneseq
        %v188 = vshrl.u32 %v187, 7
        %v189 = vsub.s32 %v186, %v188
        %v190 = vrot.slane %v176, %v189
        %v191 = vcombine.high %v183, %v183
        %192 = vrot.lane.b32.xlu0 %v183, 127
        %v193 = vpop.permute.xlu0 %192
        %194 = vrot.lane.b32.xlu0 %v191, 127
        %v195 = vpop.permute.xlu0 %194
        %196 = vrot.lane.b32.xlu0 %v190, 127
        %v197 = vpop.permute.xlu0 %196
        %vm198 = vcmask 1039360
        %v199 = vsel %vm198, %v193, %v195
        %v200 = vsel %vm198, %v195, %v197
        %vm201 = vcmask 31744
        %v203 = vsel %vm201, %v174, 0
        %vm205 = vcmask 1041408
        %v207 = vsel %vm205, %v199, 0
        %v210 = vsel %vm205, %v200, 0
        %v213 = vsel %vm205, %v197, 0
        %215 = vmatprep.subr.bf16.mxu0 %v210
        %216 = vmatpush1.bf16.msra.mxu0 %v207
        %217 = vmatprep.subr.bf16.mxu0 0
        %218 = vmatpush1.bf16.msra.mxu0 0
        %219 = vmatprep.subr.bf16.mxu0 0
        %220 = vmatpush1.bf16.msra.mxu0 0
        %221 = vmatprep.subr.bf16.mxu0 0
        %222 = vmatpush1.bf16.msra.mxu0 0
        %223 = vmatprep.subr.bf16.mxu0 0
        %224 = vmatpush1.bf16.msra.mxu0 0
        %225 = vmatprep.subr.bf16.mxu0 0
        %226 = vmatpush1.bf16.msra.mxu0 0
        %227 = vmatprep.subr.bf16.mxu0 0
        %228 = vmatpush1.bf16.msra.mxu0 0
        %229 = vmatprep.subr.bf16.mxu0 0
        %230 = vmatpush1.bf16.msra.mxu0 0
        %231 = vmatprep.subr.bf16.mxu0 0
        %232 = vmatpush1.bf16.msra.mxu0 0
        %233 = vmatprep.subr.bf16.mxu0 0
        %234 = vmatpush1.bf16.msra.mxu0 0
        %235 = vmatprep.subr.bf16.mxu0 0
        %236 = vmatpush1.bf16.msra.mxu0 0
        %237 = vmatprep.subr.bf16.mxu0 0
        %238 = vmatpush1.bf16.msra.mxu0 0
        %239 = vmatprep.subr.bf16.mxu0 0
        %240 = vmatpush1.bf16.msra.mxu0 0
        %241 = vmatprep.subr.bf16.mxu0 0
        %242 = vmatpush1.bf16.msra.mxu0 0
        %243 = vmatprep.subr.bf16.mxu0 0
        %244 = vmatpush1.bf16.msra.mxu0 0
        %245 = vmatprep.subr.bf16.mxu0 0
        %246 = vmatpush1.bf16.msra.mxu0 0
        %247 = vmatprep.mubr.bf16.mxu0 0
        %248 = vmatmul.mubr.bf16.gmra.mrb[0].mxu0 %v203
        %v249 = vpop.f32.mrb[0].mxu0
        %v250 = vadd.f32 0.0, %v249
        %v251 = vpop.f32.mrb[0].mxu0
        %v252 = vadd.f32 0.0, %v251
        %v253 = vpop.f32.mrb[0].mxu0
        %v254 = vpop.f32.mrb[0].mxu0
        %255 = vdwg.mxu0
        %256 = vmatprep.subr.bf16.mxu0 0
        %257 = vmatpush1.bf16.msra.mxu0 %v213
        %258 = vmatprep.subr.bf16.mxu0 0
        %259 = vmatpush1.bf16.msra.mxu0 0
        %260 = vmatprep.subr.bf16.mxu0 0
        %261 = vmatpush1.bf16.msra.mxu0 0
        %262 = vmatprep.subr.bf16.mxu0 0
        %263 = vmatpush1.bf16.msra.mxu0 0
        %264 = vmatprep.subr.bf16.mxu0 0
        %265 = vmatpush1.bf16.msra.mxu0 0
        %266 = vmatprep.subr.bf16.mxu0 0
        %267 = vmatpush1.bf16.msra.mxu0 0
        %268 = vmatprep.subr.bf16.mxu0 0
        %269 = vmatpush1.bf16.msra.mxu0 0
        %270 = vmatprep.subr.bf16.mxu0 0
        %271 = vmatpush1.bf16.msra.mxu0 0
        %272 = vmatprep.subr.bf16.mxu0 0
        %273 = vmatpush1.bf16.msra.mxu0 0
        %274 = vmatprep.subr.bf16.mxu0 0
        %275 = vmatpush1.bf16.msra.mxu0 0
        %276 = vmatprep.subr.bf16.mxu0 0
        %277 = vmatpush1.bf16.msra.mxu0 0
        %278 = vmatprep.subr.bf16.mxu0 0
        %279 = vmatpush1.bf16.msra.mxu0 0
        %280 = vmatprep.subr.bf16.mxu0 0
        %281 = vmatpush1.bf16.msra.mxu0 0
        %282 = vmatprep.subr.bf16.mxu0 0
        %283 = vmatpush1.bf16.msra.mxu0 0
        %284 = vmatprep.subr.bf16.mxu0 0
        %285 = vmatpush1.bf16.msra.mxu0 0
        %286 = vmatprep.subr.bf16.mxu0 0
        %287 = vmatpush1.bf16.msra.mxu0 0
        %288 = vmatprep.mubr.bf16.mxu0 0
        %289 = vmatmul.mubr.bf16.gmra.mrb[0].mxu0 %v203
        %v290 = vpop.f32.mrb[0].mxu0
        %v291 = vadd.f32 0.0, %v290
        %v292 = vpop.f32.mrb[0].mxu0
        %v293 = vpop.f32.mrb[0].mxu0
        %v294 = vpop.f32.mrb[0].mxu0
        %295 = vdwg.mxu0
        %v297 = vsel %vm201, %v172, 0
        %v300 = vsel %vm205, %v183, 0
        %v303 = vsel %vm205, %v191, 0
        %v306 = vsel %vm205, %v190, 0
        %308 = vmatprep.subr.bf16.mxu0 %v303
        %309 = vmatpush1.bf16.msra.mxu0 %v300
        %310 = vmatprep.subr.bf16.mxu0 0
        %311 = vmatpush1.bf16.msra.mxu0 0
        %312 = vmatprep.subr.bf16.mxu0 0
        %313 = vmatpush1.bf16.msra.mxu0 0
        %314 = vmatprep.subr.bf16.mxu0 0
        %315 = vmatpush1.bf16.msra.mxu0 0
        %316 = vmatprep.subr.bf16.mxu0 0
        %317 = vmatpush1.bf16.msra.mxu0 0
        %318 = vmatprep.subr.bf16.mxu0 0
        %319 = vmatpush1.bf16.msra.mxu0 0
        %320 = vmatprep.subr.bf16.mxu0 0
        %321 = vmatpush1.bf16.msra.mxu0 0
        %322 = vmatprep.subr.bf16.mxu0 0
        %323 = vmatpush1.bf16.msra.mxu0 0
        %324 = vmatprep.subr.bf16.mxu0 0
        %325 = vmatpush1.bf16.msra.mxu0 0
        %326 = vmatprep.subr.bf16.mxu0 0
        %327 = vmatpush1.bf16.msra.mxu0 0
        %328 = vmatprep.subr.bf16.mxu0 0
        %329 = vmatpush1.bf16.msra.mxu0 0
        %330 = vmatprep.subr.bf16.mxu0 0
        %331 = vmatpush1.bf16.msra.mxu0 0
        %332 = vmatprep.subr.bf16.mxu0 0
        %333 = vmatpush1.bf16.msra.mxu0 0
        %334 = vmatprep.subr.bf16.mxu0 0
        %335 = vmatpush1.bf16.msra.mxu0 0
        %336 = vmatprep.subr.bf16.mxu0 0
        %337 = vmatpush1.bf16.msra.mxu0 0
        %338 = vmatprep.subr.bf16.mxu0 0
        %339 = vmatpush1.bf16.msra.mxu0 0
        %340 = vmatprep.mubr.bf16.mxu0 0
        %341 = vmatmul.mubr.bf16.gmra.mrb[0].mxu0 %v297
        %v342 = vpop.f32.mrb[0].mxu0
        %v343 = vadd.f32 %v250, %v342
        %v344 = vpop.f32.mrb[0].mxu0
        %v345 = vadd.f32 %v252, %v344
        %v346 = vpop.f32.mrb[0].mxu0
        %v347 = vpop.f32.mrb[0].mxu0
        %348 = vdwg.mxu0
        %349 = vmatprep.subr.bf16.mxu0 0
        %350 = vmatpush1.bf16.msra.mxu0 %v306
        %351 = vmatprep.subr.bf16.mxu0 0
        %352 = vmatpush1.bf16.msra.mxu0 0
        %353 = vmatprep.subr.bf16.mxu0 0
        %354 = vmatpush1.bf16.msra.mxu0 0
        %355 = vmatprep.subr.bf16.mxu0 0
        %356 = vmatpush1.bf16.msra.mxu0 0
        %357 = vmatprep.subr.bf16.mxu0 0
        %358 = vmatpush1.bf16.msra.mxu0 0
        %359 = vmatprep.subr.bf16.mxu0 0
        %360 = vmatpush1.bf16.msra.mxu0 0
        %361 = vmatprep.subr.bf16.mxu0 0
        %362 = vmatpush1.bf16.msra.mxu0 0
        %363 = vmatprep.subr.bf16.mxu0 0
        %364 = vmatpush1.bf16.msra.mxu0 0
        %365 = vmatprep.subr.bf16.mxu0 0
        %366 = vmatpush1.bf16.msra.mxu0 0
        %367 = vmatprep.subr.bf16.mxu0 0
        %368 = vmatpush1.bf16.msra.mxu0 0
        %369 = vmatprep.subr.bf16.mxu0 0
        %370 = vmatpush1.bf16.msra.mxu0 0
        %371 = vmatprep.subr.bf16.mxu0 0
        %372 = vmatpush1.bf16.msra.mxu0 0
        %373 = vmatprep.subr.bf16.mxu0 0
        %374 = vmatpush1.bf16.msra.mxu0 0
        %375 = vmatprep.subr.bf16.mxu0 0
        %376 = vmatpush1.bf16.msra.mxu0 0
        %377 = vmatprep.subr.bf16.mxu0 0
        %378 = vmatpush1.bf16.msra.mxu0 0
        %379 = vmatprep.subr.bf16.mxu0 0
        %380 = vmatpush1.bf16.msra.mxu0 0
        %381 = vmatprep.mubr.bf16.mxu0 0
        %382 = vmatmul.mubr.bf16.gmra.mrb[0].mxu0 %v297
        %v383 = vpop.f32.mrb[0].mxu0
        %v384 = vadd.f32 %v291, %v383
        %v385 = vpop.f32.mrb[0].mxu0
        %v386 = vpop.f32.mrb[0].mxu0
        %v387 = vpop.f32.mrb[0].mxu0
        %388 = vdwg.mxu0
        %s389 = scalar_lea.vmem %s1, 8
        %v390 = vld [vmem:[%s389] sm:$0xf]
        %391 = vrot.lane.b32.xlu0 %v183, 126
        %v392 = vpop.permute.xlu0 %391
        %393 = vrot.lane.b32.xlu0 %v191, 126
        %v394 = vpop.permute.xlu0 %393
        %395 = vrot.lane.b32.xlu0 %v190, 126
        %v396 = vpop.permute.xlu0 %395
        %vm397 = vcmask 1031168
        %v398 = vsel %vm397, %v392, %v394
        %v399 = vsel %vm397, %v394, %v396
        %v401 = vsel %vm201, %v390, 0
        %v404 = vsel %vm205, %v398, 0
        %v407 = vsel %vm205, %v399, 0
        %v410 = vsel %vm205, %v396, 0
        %412 = vmatprep.subr.bf16.mxu0 %v407
        %413 = vmatpush1.bf16.msra.mxu0 %v404
        %414 = vmatprep.subr.bf16.mxu0 0
        %415 = vmatpush1.bf16.msra.mxu0 0
        %416 = vmatprep.subr.bf16.mxu0 0
        %417 = vmatpush1.bf16.msra.mxu0 0
        %418 = vmatprep.subr.bf16.mxu0 0
        %419 = vmatpush1.bf16.msra.mxu0 0
        %420 = vmatprep.subr.bf16.mxu0 0
        %421 = vmatpush1.bf16.msra.mxu0 0
        %422 = vmatprep.subr.bf16.mxu0 0
        %423 = vmatpush1.bf16.msra.mxu0 0
        %424 = vmatprep.subr.bf16.mxu0 0
        %425 = vmatpush1.bf16.msra.mxu0 0
        %426 = vmatprep.subr.bf16.mxu0 0
        %427 = vmatpush1.bf16.msra.mxu0 0
        %428 = vmatprep.subr.bf16.mxu0 0
        %429 = vmatpush1.bf16.msra.mxu0 0
        %430 = vmatprep.subr.bf16.mxu0 0
        %431 = vmatpush1.bf16.msra.mxu0 0
        %432 = vmatprep.subr.bf16.mxu0 0
        %433 = vmatpush1.bf16.msra.mxu0 0
        %434 = vmatprep.subr.bf16.mxu0 0
        %435 = vmatpush1.bf16.msra.mxu0 0
        %436 = vmatprep.subr.bf16.mxu0 0
        %437 = vmatpush1.bf16.msra.mxu0 0
        %438 = vmatprep.subr.bf16.mxu0 0
        %439 = vmatpush1.bf16.msra.mxu0 0
        %440 = vmatprep.subr.bf16.mxu0 0
        %441 = vmatpush1.bf16.msra.mxu0 0
        %442 = vmatprep.subr.bf16.mxu0 0
        %443 = vmatpush1.bf16.msra.mxu0 0
        %444 = vmatprep.mubr.bf16.mxu0 0
        %445 = vmatmul.mubr.bf16.gmra.mrb[0].mxu0 %v401
        %v446 = vpop.f32.mrb[0].mxu0
        %v447 = vadd.f32 0.0, %v446
        %v448 = vpop.f32.mrb[0].mxu0
        %v449 = vadd.f32 0.0, %v448
        %v450 = vpop.f32.mrb[0].mxu0
        %v451 = vpop.f32.mrb[0].mxu0
        %452 = vdwg.mxu0
        %453 = vmatprep.subr.bf16.mxu0 0
        %454 = vmatpush1.bf16.msra.mxu0 %v410
        %455 = vmatprep.subr.bf16.mxu0 0
        %456 = vmatpush1.bf16.msra.mxu0 0
        %457 = vmatprep.subr.bf16.mxu0 0
        %458 = vmatpush1.bf16.msra.mxu0 0
        %459 = vmatprep.subr.bf16.mxu0 0
        %460 = vmatpush1.bf16.msra.mxu0 0
        %461 = vmatprep.subr.bf16.mxu0 0
        %462 = vmatpush1.bf16.msra.mxu0 0
        %463 = vmatprep.subr.bf16.mxu0 0
        %464 = vmatpush1.bf16.msra.mxu0 0
        %465 = vmatprep.subr.bf16.mxu0 0
        %466 = vmatpush1.bf16.msra.mxu0 0
        %467 = vmatprep.subr.bf16.mxu0 0
        %468 = vmatpush1.bf16.msra.mxu0 0
        %469 = vmatprep.subr.bf16.mxu0 0
        %470 = vmatpush1.bf16.msra.mxu0 0
        %471 = vmatprep.subr.bf16.mxu0 0
        %472 = vmatpush1.bf16.msra.mxu0 0
        %473 = vmatprep.subr.bf16.mxu0 0
        %474 = vmatpush1.bf16.msra.mxu0 0
        %475 = vmatprep.subr.bf16.mxu0 0
        %476 = vmatpush1.bf16.msra.mxu0 0
        %477 = vmatprep.subr.bf16.mxu0 0
        %478 = vmatpush1.bf16.msra.mxu0 0
        %479 = vmatprep.subr.bf16.mxu0 0
        %480 = vmatpush1.bf16.msra.mxu0 0
        %481 = vmatprep.subr.bf16.mxu0 0
        %482 = vmatpush1.bf16.msra.mxu0 0
        %483 = vmatprep.subr.bf16.mxu0 0
        %484 = vmatpush1.bf16.msra.mxu0 0
        %485 = vmatprep.mubr.bf16.mxu0 0
        %486 = vmatmul.mubr.bf16.gmra.mrb[0].mxu0 %v401
        %v487 = vpop.f32.mrb[0].mxu0
        %v488 = vadd.f32 0.0, %v487
        %v489 = vpop.f32.mrb[0].mxu0
        %v490 = vpop.f32.mrb[0].mxu0
        %v491 = vpop.f32.mrb[0].mxu0
        %492 = vdwg.mxu0
        %v493 = vadd.f32 %v343, %v447
        %v494 = vadd.f32 %v345, %v449
        %v495 = vadd.f32 %v384, %v488
        %s496 = scalar_lea.vmem %s1, 12
        %v497 = vld [vmem:[%s496] sm:$0xf]
        %498 = vrot.lane.b32.xlu0 %v183, 110
        %v499 = vpop.permute.xlu0 %498
        %500 = vrot.lane.b32.xlu0 %v191, 110
        %v501 = vpop.permute.xlu0 %500
        %502 = vrot.lane.b32.xlu0 %v190, 110
        %v503 = vpop.permute.xlu0 %502
        %vm504 = vcmask 900096
        %v505 = vsel %vm504, %v499, %v501
        %v506 = vsel %vm504, %v501, %v503
        %v508 = vsel %vm201, %v497, 0
        %v511 = vsel %vm205, %v505, 0
        %v514 = vsel %vm205, %v506, 0
        %v517 = vsel %vm205, %v503, 0
        %519 = vmatprep.subr.bf16.mxu0 %v514
        %520 = vmatpush1.bf16.msra.mxu0 %v511
        %521 = vmatprep.subr.bf16.mxu0 0
        %522 = vmatpush1.bf16.msra.mxu0 0
        %523 = vmatprep.subr.bf16.mxu0 0
        %524 = vmatpush1.bf16.msra.mxu0 0
        %525 = vmatprep.subr.bf16.mxu0 0
        %526 = vmatpush1.bf16.msra.mxu0 0
        %527 = vmatprep.subr.bf16.mxu0 0
        %528 = vmatpush1.bf16.msra.mxu0 0
        %529 = vmatprep.subr.bf16.mxu0 0
        %530 = vmatpush1.bf16.msra.mxu0 0
        %531 = vmatprep.subr.bf16.mxu0 0
        %532 = vmatpush1.bf16.msra.mxu0 0
        %533 = vmatprep.subr.bf16.mxu0 0
        %534 = vmatpush1.bf16.msra.mxu0 0
        %535 = vmatprep.subr.bf16.mxu0 0
        %536 = vmatpush1.bf16.msra.mxu0 0
        %537 = vmatprep.subr.bf16.mxu0 0
        %538 = vmatpush1.bf16.msra.mxu0 0
        %539 = vmatprep.subr.bf16.mxu0 0
        %540 = vmatpush1.bf16.msra.mxu0 0
        %541 = vmatprep.subr.bf16.mxu0 0
        %542 = vmatpush1.bf16.msra.mxu0 0
        %543 = vmatprep.subr.bf16.mxu0 0
        %544 = vmatpush1.bf16.msra.mxu0 0
        %545 = vmatprep.subr.bf16.mxu0 0
        %546 = vmatpush1.bf16.msra.mxu0 0
        %547 = vmatprep.subr.bf16.mxu0 0
        %548 = vmatpush1.bf16.msra.mxu0 0
        %549 = vmatprep.subr.bf16.mxu0 0
        %550 = vmatpush1.bf16.msra.mxu0 0
        %551 = vmatprep.mubr.bf16.mxu0 0
        %552 = vmatmul.mubr.bf16.gmra.mrb[0].mxu0 %v508
        %v553 = vpop.f32.mrb[0].mxu0
        %v554 = vadd.f32 0.0, %v553
        %v555 = vpop.f32.mrb[0].mxu0
        %v556 = vadd.f32 0.0, %v555
        %v557 = vpop.f32.mrb[0].mxu0
        %v558 = vpop.f32.mrb[0].mxu0
        %559 = vdwg.mxu0
        %560 = vmatprep.subr.bf16.mxu0 0
        %561 = vmatpush1.bf16.msra.mxu0 %v517
        %562 = vmatprep.subr.bf16.mxu0 0
        %563 = vmatpush1.bf16.msra.mxu0 0
        %564 = vmatprep.subr.bf16.mxu0 0
        %565 = vmatpush1.bf16.msra.mxu0 0
        %566 = vmatprep.subr.bf16.mxu0 0
        %567 = vmatpush1.bf16.msra.mxu0 0
        %568 = vmatprep.subr.bf16.mxu0 0
        %569 = vmatpush1.bf16.msra.mxu0 0
        %570 = vmatprep.subr.bf16.mxu0 0
        %571 = vmatpush1.bf16.msra.mxu0 0
        %572 = vmatprep.subr.bf16.mxu0 0
        %573 = vmatpush1.bf16.msra.mxu0 0
        %574 = vmatprep.subr.bf16.mxu0 0
        %575 = vmatpush1.bf16.msra.mxu0 0
        %576 = vmatprep.subr.bf16.mxu0 0
        %577 = vmatpush1.bf16.msra.mxu0 0
        %578 = vmatprep.subr.bf16.mxu0 0
        %579 = vmatpush1.bf16.msra.mxu0 0
        %580 = vmatprep.subr.bf16.mxu0 0
        %581 = vmatpush1.bf16.msra.mxu0 0
        %582 = vmatprep.subr.bf16.mxu0 0
        %583 = vmatpush1.bf16.msra.mxu0 0
        %584 = vmatprep.subr.bf16.mxu0 0
        %585 = vmatpush1.bf16.msra.mxu0 0
        %586 = vmatprep.subr.bf16.mxu0 0
        %587 = vmatpush1.bf16.msra.mxu0 0
        %588 = vmatprep.subr.bf16.mxu0 0
        %589 = vmatpush1.bf16.msra.mxu0 0
        %590 = vmatprep.subr.bf16.mxu0 0
        %591 = vmatpush1.bf16.msra.mxu0 0
        %592 = vmatprep.mubr.bf16.mxu0 0
        %593 = vmatmul.mubr.bf16.gmra.mrb[0].mxu0 %v508
        %v594 = vpop.f32.mrb[0].mxu0
        %v595 = vadd.f32 0.0, %v594
        %v596 = vpop.f32.mrb[0].mxu0
        %v597 = vpop.f32.mrb[0].mxu0
        %v598 = vpop.f32.mrb[0].mxu0
        %599 = vdwg.mxu0
        %v600 = vadd.f32 %v493, %v554
        %v601 = vadd.f32 %v494, %v556
        %v602 = vadd.f32 %v495, %v595
        %s603 = scalar_lea.vmem %s1, 16
        %v604 = vld [vmem:[%s603] sm:$0xf]
        %605 = vrot.lane.b32.xlu0 %v183, 109
        %v606 = vpop.permute.xlu0 %605
        %607 = vrot.lane.b32.xlu0 %v191, 109
        %v608 = vpop.permute.xlu0 %607
        %609 = vrot.lane.b32.xlu0 %v190, 109
        %v610 = vpop.permute.xlu0 %609
        %vm611 = vcmask 891904
        %v612 = vsel %vm611, %v606, %v608
        %v613 = vsel %vm611, %v608, %v610
        %v615 = vsel %vm201, %v604, 0
        %v618 = vsel %vm205, %v612, 0
        %v621 = vsel %vm205, %v613, 0
        %v624 = vsel %vm205, %v610, 0
        %626 = vmatprep.subr.bf16.mxu0 %v621
        %627 = vmatpush1.bf16.msra.mxu0 %v618
        %628 = vmatprep.subr.bf16.mxu0 0
        %629 = vmatpush1.bf16.msra.mxu0 0
        %630 = vmatprep.subr.bf16.mxu0 0
        %631 = vmatpush1.bf16.msra.mxu0 0
        %632 = vmatprep.subr.bf16.mxu0 0
        %633 = vmatpush1.bf16.msra.mxu0 0
        %634 = vmatprep.subr.bf16.mxu0 0
        %635 = vmatpush1.bf16.msra.mxu0 0
        %636 = vmatprep.subr.bf16.mxu0 0
        %637 = vmatpush1.bf16.msra.mxu0 0
        %638 = vmatprep.subr.bf16.mxu0 0
        %639 = vmatpush1.bf16.msra.mxu0 0
        %640 = vmatprep.subr.bf16.mxu0 0
        %641 = vmatpush1.bf16.msra.mxu0 0
        %642 = vmatprep.subr.bf16.mxu0 0
        %643 = vmatpush1.bf16.msra.mxu0 0
        %644 = vmatprep.subr.bf16.mxu0 0
        %645 = vmatpush1.bf16.msra.mxu0 0
        %646 = vmatprep.subr.bf16.mxu0 0
        %647 = vmatpush1.bf16.msra.mxu0 0
        %648 = vmatprep.subr.bf16.mxu0 0
        %649 = vmatpush1.bf16.msra.mxu0 0
        %650 = vmatprep.subr.bf16.mxu0 0
        %651 = vmatpush1.bf16.msra.mxu0 0
        %652 = vmatprep.subr.bf16.mxu0 0
        %653 = vmatpush1.bf16.msra.mxu0 0
        %654 = vmatprep.subr.bf16.mxu0 0
        %655 = vmatpush1.bf16.msra.mxu0 0
        %656 = vmatprep.subr.bf16.mxu0 0
        %657 = vmatpush1.bf16.msra.mxu0 0
        %658 = vmatprep.mubr.bf16.mxu0 0
        %659 = vmatmul.mubr.bf16.gmra.mrb[0].mxu0 %v615
        %v660 = vpop.f32.mrb[0].mxu0
        %v661 = vadd.f32 0.0, %v660
        %v662 = vpop.f32.mrb[0].mxu0
        %v663 = vadd.f32 0.0, %v662
        %v664 = vpop.f32.mrb[0].mxu0
        %v665 = vpop.f32.mrb[0].mxu0
        %666 = vdwg.mxu0
        %667 = vmatprep.subr.bf16.mxu0 0
        %668 = vmatpush1.bf16.msra.mxu0 %v624
        %669 = vmatprep.subr.bf16.mxu0 0
        %670 = vmatpush1.bf16.msra.mxu0 0
        %671 = vmatprep.subr.bf16.mxu0 0
        %672 = vmatpush1.bf16.msra.mxu0 0
        %673 = vmatprep.subr.bf16.mxu0 0
        %674 = vmatpush1.bf16.msra.mxu0 0
        %675 = vmatprep.subr.bf16.mxu0 0
        %676 = vmatpush1.bf16.msra.mxu0 0
        %677 = vmatprep.subr.bf16.mxu0 0
        %678 = vmatpush1.bf16.msra.mxu0 0
        %679 = vmatprep.subr.bf16.mxu0 0
        %680 = vmatpush1.bf16.msra.mxu0 0
        %681 = vmatprep.subr.bf16.mxu0 0
        %682 = vmatpush1.bf16.msra.mxu0 0
        %683 = vmatprep.subr.bf16.mxu0 0
        %684 = vmatpush1.bf16.msra.mxu0 0
        %685 = vmatprep.subr.bf16.mxu0 0
        %686 = vmatpush1.bf16.msra.mxu0 0
        %687 = vmatprep.subr.bf16.mxu0 0
        %688 = vmatpush1.bf16.msra.mxu0 0
        %689 = vmatprep.subr.bf16.mxu0 0
        %690 = vmatpush1.bf16.msra.mxu0 0
        %691 = vmatprep.subr.bf16.mxu0 0
        %692 = vmatpush1.bf16.msra.mxu0 0
        %693 = vmatprep.subr.bf16.mxu0 0
        %694 = vmatpush1.bf16.msra.mxu0 0
        %695 = vmatprep.subr.bf16.mxu0 0
        %696 = vmatpush1.bf16.msra.mxu0 0
        %697 = vmatprep.subr.bf16.mxu0 0
        %698 = vmatpush1.bf16.msra.mxu0 0
        %699 = vmatprep.mubr.bf16.mxu0 0
        %700 = vmatmul.mubr.bf16.gmra.mrb[0].mxu0 %v615
        %v701 = vpop.f32.mrb[0].mxu0
        %v702 = vadd.f32 0.0, %v701
        %v703 = vpop.f32.mrb[0].mxu0
        %v704 = vpop.f32.mrb[0].mxu0
        %v705 = vpop.f32.mrb[0].mxu0
        %706 = vdwg.mxu0
        %v707 = vadd.f32 %v600, %v661
        %v708 = vadd.f32 %v601, %v663
        %v709 = vadd.f32 %v602, %v702
        %s710 = scalar_lea.vmem %s1, 20
        %v711 = vld [vmem:[%s710] sm:$0xf]
        %712 = vrot.lane.b32.xlu0 %v183, 108
        %v713 = vpop.permute.xlu0 %712
        %714 = vrot.lane.b32.xlu0 %v191, 108
        %v715 = vpop.permute.xlu0 %714
        %716 = vrot.lane.b32.xlu0 %v190, 108
        %v717 = vpop.permute.xlu0 %716
        %vm718 = vcmask 883712
        %v719 = vsel %vm718, %v713, %v715
        %v720 = vsel %vm718, %v715, %v717
        %v722 = vsel %vm201, %v711, 0
        %v725 = vsel %vm205, %v719, 0
        %v728 = vsel %vm205, %v720, 0
        %v731 = vsel %vm205, %v717, 0
        %733 = vmatprep.subr.bf16.mxu0 %v728
        %734 = vmatpush1.bf16.msra.mxu0 %v725
        %735 = vmatprep.subr.bf16.mxu0 0
        %736 = vmatpush1.bf16.msra.mxu0 0
        %737 = vmatprep.subr.bf16.mxu0 0
        %738 = vmatpush1.bf16.msra.mxu0 0
        %739 = vmatprep.subr.bf16.mxu0 0
        %740 = vmatpush1.bf16.msra.mxu0 0
        %741 = vmatprep.subr.bf16.mxu0 0
        %742 = vmatpush1.bf16.msra.mxu0 0
        %743 = vmatprep.subr.bf16.mxu0 0
        %744 = vmatpush1.bf16.msra.mxu0 0
        %745 = vmatprep.subr.bf16.mxu0 0
        %746 = vmatpush1.bf16.msra.mxu0 0
        %747 = vmatprep.subr.bf16.mxu0 0
        %748 = vmatpush1.bf16.msra.mxu0 0
        %749 = vmatprep.subr.bf16.mxu0 0
        %750 = vmatpush1.bf16.msra.mxu0 0
        %751 = vmatprep.subr.bf16.mxu0 0
        %752 = vmatpush1.bf16.msra.mxu0 0
        %753 = vmatprep.subr.bf16.mxu0 0
        %754 = vmatpush1.bf16.msra.mxu0 0
        %755 = vmatprep.subr.bf16.mxu0 0
        %756 = vmatpush1.bf16.msra.mxu0 0
        %757 = vmatprep.subr.bf16.mxu0 0
        %758 = vmatpush1.bf16.msra.mxu0 0
        %759 = vmatprep.subr.bf16.mxu0 0
        %760 = vmatpush1.bf16.msra.mxu0 0
        %761 = vmatprep.subr.bf16.mxu0 0
        %762 = vmatpush1.bf16.msra.mxu0 0
        %763 = vmatprep.subr.bf16.mxu0 0
        %764 = vmatpush1.bf16.msra.mxu0 0
        %765 = vmatprep.mubr.bf16.mxu0 0
        %766 = vmatmul.mubr.bf16.gmra.mrb[0].mxu0 %v722
        %v767 = vpop.f32.mrb[0].mxu0
        %v768 = vadd.f32 0.0, %v767
        %v769 = vpop.f32.mrb[0].mxu0
        %v770 = vadd.f32 0.0, %v769
        %v771 = vpop.f32.mrb[0].mxu0
        %v772 = vpop.f32.mrb[0].mxu0
        %773 = vdwg.mxu0
        %774 = vmatprep.subr.bf16.mxu0 0
        %775 = vmatpush1.bf16.msra.mxu0 %v731
        %776 = vmatprep.subr.bf16.mxu0 0
        %777 = vmatpush1.bf16.msra.mxu0 0
        %778 = vmatprep.subr.bf16.mxu0 0
        %779 = vmatpush1.bf16.msra.mxu0 0
        %780 = vmatprep.subr.bf16.mxu0 0
        %781 = vmatpush1.bf16.msra.mxu0 0
        %782 = vmatprep.subr.bf16.mxu0 0
        %783 = vmatpush1.bf16.msra.mxu0 0
        %784 = vmatprep.subr.bf16.mxu0 0
        %785 = vmatpush1.bf16.msra.mxu0 0
        %786 = vmatprep.subr.bf16.mxu0 0
        %787 = vmatpush1.bf16.msra.mxu0 0
        %788 = vmatprep.subr.bf16.mxu0 0
        %789 = vmatpush1.bf16.msra.mxu0 0
        %790 = vmatprep.subr.bf16.mxu0 0
        %791 = vmatpush1.bf16.msra.mxu0 0
        %792 = vmatprep.subr.bf16.mxu0 0
        %793 = vmatpush1.bf16.msra.mxu0 0
        %794 = vmatprep.subr.bf16.mxu0 0
        %795 = vmatpush1.bf16.msra.mxu0 0
        %796 = vmatprep.subr.bf16.mxu0 0
        %797 = vmatpush1.bf16.msra.mxu0 0
        %798 = vmatprep.subr.bf16.mxu0 0
        %799 = vmatpush1.bf16.msra.mxu0 0
        %800 = vmatprep.subr.bf16.mxu0 0
        %801 = vmatpush1.bf16.msra.mxu0 0
        %802 = vmatprep.subr.bf16.mxu0 0
        %803 = vmatpush1.bf16.msra.mxu0 0
        %804 = vmatprep.subr.bf16.mxu0 0
        %805 = vmatpush1.bf16.msra.mxu0 0
        %806 = vmatprep.mubr.bf16.mxu0 0
        %807 = vmatmul.mubr.bf16.gmra.mrb[0].mxu0 %v722
        %v808 = vpop.f32.mrb[0].mxu0
        %v809 = vadd.f32 0.0, %v808
        %v810 = vpop.f32.mrb[0].mxu0
        %v811 = vpop.f32.mrb[0].mxu0
        %v812 = vpop.f32.mrb[0].mxu0
        %813 = vdwg.mxu0
        %v814 = vadd.f32 %v707, %v768
        %v815 = vadd.f32 %v708, %v770
        %v816 = vadd.f32 %v709, %v809
        %s817 = scalar_lea.vmem %s1, 24
        %v818 = vld [vmem:[%s817] sm:$0xf]
        %819 = vrot.lane.b32.xlu0 %v183, 92
        %v820 = vpop.permute.xlu0 %819
        %821 = vrot.lane.b32.xlu0 %v191, 92
        %v822 = vpop.permute.xlu0 %821
        %823 = vrot.lane.b32.xlu0 %v190, 92
        %v824 = vpop.permute.xlu0 %823
        %vm825 = vcmask 752640
        %v826 = vsel %vm825, %v820, %v822
        %v827 = vsel %vm825, %v822, %v824
        %v829 = vsel %vm201, %v818, 0
        %v832 = vsel %vm205, %v826, 0
        %v835 = vsel %vm205, %v827, 0
        %v838 = vsel %vm205, %v824, 0
        %840 = vmatprep.subr.bf16.mxu0 %v835
        %841 = vmatpush1.bf16.msra.mxu0 %v832
        %842 = vmatprep.subr.bf16.mxu0 0
        %843 = vmatpush1.bf16.msra.mxu0 0
        %844 = vmatprep.subr.bf16.mxu0 0
        %845 = vmatpush1.bf16.msra.mxu0 0
        %846 = vmatprep.subr.bf16.mxu0 0
        %847 = vmatpush1.bf16.msra.mxu0 0
        %848 = vmatprep.subr.bf16.mxu0 0
        %849 = vmatpush1.bf16.msra.mxu0 0
        %850 = vmatprep.subr.bf16.mxu0 0
        %851 = vmatpush1.bf16.msra.mxu0 0
        %852 = vmatprep.subr.bf16.mxu0 0
        %853 = vmatpush1.bf16.msra.mxu0 0
        %854 = vmatprep.subr.bf16.mxu0 0
        %855 = vmatpush1.bf16.msra.mxu0 0
        %856 = vmatprep.subr.bf16.mxu0 0
        %857 = vmatpush1.bf16.msra.mxu0 0
        %858 = vmatprep.subr.bf16.mxu0 0
        %859 = vmatpush1.bf16.msra.mxu0 0
        %860 = vmatprep.subr.bf16.mxu0 0
        %861 = vmatpush1.bf16.msra.mxu0 0
        %862 = vmatprep.subr.bf16.mxu0 0
        %863 = vmatpush1.bf16.msra.mxu0 0
        %864 = vmatprep.subr.bf16.mxu0 0
        %865 = vmatpush1.bf16.msra.mxu0 0
        %866 = vmatprep.subr.bf16.mxu0 0
        %867 = vmatpush1.bf16.msra.mxu0 0
        %868 = vmatprep.subr.bf16.mxu0 0
        %869 = vmatpush1.bf16.msra.mxu0 0
        %870 = vmatprep.subr.bf16.mxu0 0
        %871 = vmatpush1.bf16.msra.mxu0 0
        %872 = vmatprep.mubr.bf16.mxu0 0
        %873 = vmatmul.mubr.bf16.gmra.mrb[0].mxu0 %v829
        %v874 = vpop.f32.mrb[0].mxu0
        %v875 = vadd.f32 0.0, %v874
        %v876 = vpop.f32.mrb[0].mxu0
        %v877 = vadd.f32 0.0, %v876
        %v878 = vpop.f32.mrb[0].mxu0
        %v879 = vpop.f32.mrb[0].mxu0
        %880 = vdwg.mxu0
        %881 = vmatprep.subr.bf16.mxu0 0
        %882 = vmatpush1.bf16.msra.mxu0 %v838
        %883 = vmatprep.subr.bf16.mxu0 0
        %884 = vmatpush1.bf16.msra.mxu0 0
        %885 = vmatprep.subr.bf16.mxu0 0
        %886 = vmatpush1.bf16.msra.mxu0 0
        %887 = vmatprep.subr.bf16.mxu0 0
        %888 = vmatpush1.bf16.msra.mxu0 0
        %889 = vmatprep.subr.bf16.mxu0 0
        %890 = vmatpush1.bf16.msra.mxu0 0
        %891 = vmatprep.subr.bf16.mxu0 0
        %892 = vmatpush1.bf16.msra.mxu0 0
        %893 = vmatprep.subr.bf16.mxu0 0
        %894 = vmatpush1.bf16.msra.mxu0 0
        %895 = vmatprep.subr.bf16.mxu0 0
        %896 = vmatpush1.bf16.msra.mxu0 0
        %897 = vmatprep.subr.bf16.mxu0 0
        %898 = vmatpush1.bf16.msra.mxu0 0
        %899 = vmatprep.subr.bf16.mxu0 0
        %900 = vmatpush1.bf16.msra.mxu0 0
        %901 = vmatprep.subr.bf16.mxu0 0
        %902 = vmatpush1.bf16.msra.mxu0 0
        %903 = vmatprep.subr.bf16.mxu0 0
        %904 = vmatpush1.bf16.msra.mxu0 0
        %905 = vmatprep.subr.bf16.mxu0 0
        %906 = vmatpush1.bf16.msra.mxu0 0
        %907 = vmatprep.subr.bf16.mxu0 0
        %908 = vmatpush1.bf16.msra.mxu0 0
        %909 = vmatprep.subr.bf16.mxu0 0
        %910 = vmatpush1.bf16.msra.mxu0 0
        %911 = vmatprep.subr.bf16.mxu0 0
        %912 = vmatpush1.bf16.msra.mxu0 0
        %913 = vmatprep.mubr.bf16.mxu0 0
        %914 = vmatmul.mubr.bf16.gmra.mrb[0].mxu0 %v829
        %v915 = vpop.f32.mrb[0].mxu0
        %v916 = vadd.f32 0.0, %v915
        %v917 = vpop.f32.mrb[0].mxu0
        %v918 = vpop.f32.mrb[0].mxu0
        %v919 = vpop.f32.mrb[0].mxu0
        %920 = vdwg.mxu0
        %v921 = vadd.f32 %v814, %v875
        %v922 = vadd.f32 %v815, %v877
        %v923 = vadd.f32 %v816, %v916
        %s924 = scalar_lea.vmem %s1, 28
        %v925 = vld [vmem:[%s924] sm:$0xf]
        %926 = vrot.lane.b32.xlu0 %v183, 91
        %v927 = vpop.permute.xlu0 %926
        %928 = vrot.lane.b32.xlu0 %v191, 91
        %v929 = vpop.permute.xlu0 %928
        %930 = vrot.lane.b32.xlu0 %v190, 91
        %v931 = vpop.permute.xlu0 %930
        %vm932 = vcmask 744448
        %v933 = vsel %vm932, %v927, %v929
        %v934 = vsel %vm932, %v929, %v931
        %v936 = vsel %vm201, %v925, 0
        %v939 = vsel %vm205, %v933, 0
        %v942 = vsel %vm205, %v934, 0
        %v945 = vsel %vm205, %v931, 0
        %947 = vmatprep.subr.bf16.mxu0 %v942
        %948 = vmatpush1.bf16.msra.mxu0 %v939
        %949 = vmatprep.subr.bf16.mxu0 0
        %950 = vmatpush1.bf16.msra.mxu0 0
        %951 = vmatprep.subr.bf16.mxu0 0
        %952 = vmatpush1.bf16.msra.mxu0 0
        %953 = vmatprep.subr.bf16.mxu0 0
        %954 = vmatpush1.bf16.msra.mxu0 0
        %955 = vmatprep.subr.bf16.mxu0 0
        %956 = vmatpush1.bf16.msra.mxu0 0
        %957 = vmatprep.subr.bf16.mxu0 0
        %958 = vmatpush1.bf16.msra.mxu0 0
        %959 = vmatprep.subr.bf16.mxu0 0
        %960 = vmatpush1.bf16.msra.mxu0 0
        %961 = vmatprep.subr.bf16.mxu0 0
        %962 = vmatpush1.bf16.msra.mxu0 0
        %963 = vmatprep.subr.bf16.mxu0 0
        %964 = vmatpush1.bf16.msra.mxu0 0
        %965 = vmatprep.subr.bf16.mxu0 0
        %966 = vmatpush1.bf16.msra.mxu0 0
        %967 = vmatprep.subr.bf16.mxu0 0
        %968 = vmatpush1.bf16.msra.mxu0 0
        %969 = vmatprep.subr.bf16.mxu0 0
        %970 = vmatpush1.bf16.msra.mxu0 0
        %971 = vmatprep.subr.bf16.mxu0 0
        %972 = vmatpush1.bf16.msra.mxu0 0
        %973 = vmatprep.subr.bf16.mxu0 0
        %974 = vmatpush1.bf16.msra.mxu0 0
        %975 = vmatprep.subr.bf16.mxu0 0
        %976 = vmatpush1.bf16.msra.mxu0 0
        %977 = vmatprep.subr.bf16.mxu0 0
        %978 = vmatpush1.bf16.msra.mxu0 0
        %979 = vmatprep.mubr.bf16.mxu0 0
        %980 = vmatmul.mubr.bf16.gmra.mrb[0].mxu0 %v936
        %v981 = vpop.f32.mrb[0].mxu0
        %v982 = vadd.f32 0.0, %v981
        %v983 = vpop.f32.mrb[0].mxu0
        %v984 = vadd.f32 0.0, %v983
        %v985 = vpop.f32.mrb[0].mxu0
        %v986 = vpop.f32.mrb[0].mxu0
        %987 = vdwg.mxu0
        %988 = vmatprep.subr.bf16.mxu0 0
        %989 = vmatpush1.bf16.msra.mxu0 %v945
        %990 = vmatprep.subr.bf16.mxu0 0
        %991 = vmatpush1.bf16.msra.mxu0 0
        %992 = vmatprep.subr.bf16.mxu0 0
        %993 = vmatpush1.bf16.msra.mxu0 0
        %994 = vmatprep.subr.bf16.mxu0 0
        %995 = vmatpush1.bf16.msra.mxu0 0
        %996 = vmatprep.subr.bf16.mxu0 0
        %997 = vmatpush1.bf16.msra.mxu0 0
        %998 = vmatprep.subr.bf16.mxu0 0
        %999 = vmatpush1.bf16.msra.mxu0 0
        %1000 = vmatprep.subr.bf16.mxu0 0
        %1001 = vmatpush1.bf16.msra.mxu0 0
        %1002 = vmatprep.subr.bf16.mxu0 0
        %1003 = vmatpush1.bf16.msra.mxu0 0
        %1004 = vmatprep.subr.bf16.mxu0 0
        %1005 = vmatpush1.bf16.msra.mxu0 0
        %1006 = vmatprep.subr.bf16.mxu0 0
        %1007 = vmatpush1.bf16.msra.mxu0 0
        %1008 = vmatprep.subr.bf16.mxu0 0
        %1009 = vmatpush1.bf16.msra.mxu0 0
        %1010 = vmatprep.subr.bf16.mxu0 0
        %1011 = vmatpush1.bf16.msra.mxu0 0
        %1012 = vmatprep.subr.bf16.mxu0 0
        %1013 = vmatpush1.bf16.msra.mxu0 0
        %1014 = vmatprep.subr.bf16.mxu0 0
        %1015 = vmatpush1.bf16.msra.mxu0 0
        %1016 = vmatprep.subr.bf16.mxu0 0
        %1017 = vmatpush1.bf16.msra.mxu0 0
        %1018 = vmatprep.subr.bf16.mxu0 0
        %1019 = vmatpush1.bf16.msra.mxu0 0
        %1020 = vmatprep.mubr.bf16.mxu0 0
        %1021 = vmatmul.mubr.bf16.gmra.mrb[0].mxu0 %v936
        %v1022 = vpop.f32.mrb[0].mxu0
        %v1023 = vadd.f32 0.0, %v1022
        %v1024 = vpop.f32.mrb[0].mxu0
        %v1025 = vpop.f32.mrb[0].mxu0
        %v1026 = vpop.f32.mrb[0].mxu0
        %1027 = vdwg.mxu0
        %v1028 = vadd.f32 %v921, %v982
        %v1029 = vadd.f32 %v922, %v984
        %v1030 = vadd.f32 %v923, %v1023
        %s1031 = scalar_lea.vmem %s1, 32
        %v1032 = vld [vmem:[%s1031] sm:$0xf]
        %1033 = vrot.lane.b32.xlu0 %v183, 90
        %v1034 = vpop.permute.xlu0 %1033
        %1035 = vrot.lane.b32.xlu0 %v191, 90
        %v1036 = vpop.permute.xlu0 %1035
        %1037 = vrot.lane.b32.xlu0 %v190, 90
        %v1038 = vpop.permute.xlu0 %1037
        %vm1039 = vcmask 736256
        %v1040 = vsel %vm1039, %v1034, %v1036
        %v1041 = vsel %vm1039, %v1036, %v1038
        %v1043 = vsel %vm201, %v1032, 0
        %v1046 = vsel %vm205, %v1040, 0
        %v1049 = vsel %vm205, %v1041, 0
        %v1052 = vsel %vm205, %v1038, 0
        %1054 = vmatprep.subr.bf16.mxu0 %v1049
        %1055 = vmatpush1.bf16.msra.mxu0 %v1046
        %1056 = vmatprep.subr.bf16.mxu0 0
        %1057 = vmatpush1.bf16.msra.mxu0 0
        %1058 = vmatprep.subr.bf16.mxu0 0
        %1059 = vmatpush1.bf16.msra.mxu0 0
        %1060 = vmatprep.subr.bf16.mxu0 0
        %1061 = vmatpush1.bf16.msra.mxu0 0
        %1062 = vmatprep.subr.bf16.mxu0 0
        %1063 = vmatpush1.bf16.msra.mxu0 0
        %1064 = vmatprep.subr.bf16.mxu0 0
        %1065 = vmatpush1.bf16.msra.mxu0 0
        %1066 = vmatprep.subr.bf16.mxu0 0
        %1067 = vmatpush1.bf16.msra.mxu0 0
        %1068 = vmatprep.subr.bf16.mxu0 0
        %1069 = vmatpush1.bf16.msra.mxu0 0
        %1070 = vmatprep.subr.bf16.mxu0 0
        %1071 = vmatpush1.bf16.msra.mxu0 0
        %1072 = vmatprep.subr.bf16.mxu0 0
        %1073 = vmatpush1.bf16.msra.mxu0 0
        %1074 = vmatprep.subr.bf16.mxu0 0
        %1075 = vmatpush1.bf16.msra.mxu0 0
        %1076 = vmatprep.subr.bf16.mxu0 0
        %1077 = vmatpush1.bf16.msra.mxu0 0
        %1078 = vmatprep.subr.bf16.mxu0 0
        %1079 = vmatpush1.bf16.msra.mxu0 0
        %1080 = vmatprep.subr.bf16.mxu0 0
        %1081 = vmatpush1.bf16.msra.mxu0 0
        %1082 = vmatprep.subr.bf16.mxu0 0
        %1083 = vmatpush1.bf16.msra.mxu0 0
        %1084 = vmatprep.subr.bf16.mxu0 0
        %1085 = vmatpush1.bf16.msra.mxu0 0
        %1086 = vmatprep.mubr.bf16.mxu0 0
        %1087 = vmatmul.mubr.bf16.gmra.mrb[0].mxu0 %v1043
        %v1088 = vpop.f32.mrb[0].mxu0
        %v1089 = vadd.f32 0.0, %v1088
        %v1090 = vpop.f32.mrb[0].mxu0
        %v1091 = vadd.f32 0.0, %v1090
        %v1092 = vpop.f32.mrb[0].mxu0
        %v1093 = vpop.f32.mrb[0].mxu0
        %1094 = vdwg.mxu0
        %1095 = vmatprep.subr.bf16.mxu0 0
        %1096 = vmatpush1.bf16.msra.mxu0 %v1052
        %1097 = vmatprep.subr.bf16.mxu0 0
        %1098 = vmatpush1.bf16.msra.mxu0 0
        %1099 = vmatprep.subr.bf16.mxu0 0
        %1100 = vmatpush1.bf16.msra.mxu0 0
        %1101 = vmatprep.subr.bf16.mxu0 0
        %1102 = vmatpush1.bf16.msra.mxu0 0
        %1103 = vmatprep.subr.bf16.mxu0 0
        %1104 = vmatpush1.bf16.msra.mxu0 0
        %1105 = vmatprep.subr.bf16.mxu0 0
        %1106 = vmatpush1.bf16.msra.mxu0 0
        %1107 = vmatprep.subr.bf16.mxu0 0
        %1108 = vmatpush1.bf16.msra.mxu0 0
        %1109 = vmatprep.subr.bf16.mxu0 0
        %1110 = vmatpush1.bf16.msra.mxu0 0
        %1111 = vmatprep.subr.bf16.mxu0 0
        %1112 = vmatpush1.bf16.msra.mxu0 0
        %1113 = vmatprep.subr.bf16.mxu0 0
        %1114 = vmatpush1.bf16.msra.mxu0 0
        %1115 = vmatprep.subr.bf16.mxu0 0
        %1116 = vmatpush1.bf16.msra.mxu0 0
        %1117 = vmatprep.subr.bf16.mxu0 0
        %1118 = vmatpush1.bf16.msra.mxu0 0
        %1119 = vmatprep.subr.bf16.mxu0 0
        %1120 = vmatpush1.bf16.msra.mxu0 0
        %1121 = vmatprep.subr.bf16.mxu0 0
        %1122 = vmatpush1.bf16.msra.mxu0 0
        %1123 = vmatprep.subr.bf16.mxu0 0
        %1124 = vmatpush1.bf16.msra.mxu0 0
        %1125 = vmatprep.subr.bf16.mxu0 0
        %1126 = vmatpush1.bf16.msra.mxu0 0
        %1127 = vmatprep.mubr.bf16.mxu0 0
        %1128 = vmatmul.mubr.bf16.gmra.mrb[0].mxu0 %v1043
        %v1129 = vpop.f32.mrb[0].mxu0
        %v1130 = vadd.f32 0.0, %v1129
        %v1131 = vpop.f32.mrb[0].mxu0
        %v1132 = vpop.f32.mrb[0].mxu0
        %v1133 = vpop.f32.mrb[0].mxu0
        %1134 = vdwg.mxu0
        %v1135 = vadd.f32 %v1028, %v1089
        %v1136 = vadd.f32 %v1029, %v1091
        %v1137 = vadd.f32 %v1030, %v1130
        %v1139 = vlaneseq
        %v1140 = vshrl.u32 %v1139, 7
        %v1141 = vsub.s32 0, %v1140
        %v1142 = vrot.slane %v171, %v1141
        %v1143 = vlaneseq
        %v1144 = vshrl.u32 %v1143, 7
        %v1145 = vsub.s32 1, %v1144
        %v1146 = vrot.slane %v171, %v1145
        %v1147 = vlaneseq
        %v1148 = vshrl.u32 %v1147, 7
        %v1149 = vsub.s32 2, %v1148
        %v1150 = vrot.slane %v171, %v1149
        %v1154 = vmul.f32 %v1135, %v1142
        %v1155 = vmul.f32 %v1136, %v1146
        %v1156 = vmul.f32 %v1137, %v1150
        %v1157 = vadd.f32 %v1154, %v1155
        %vm1158 = vcmask 261120
        %v1159 = vsel %vm1158, %v1156, 0.0
        %v1160 = vadd.f32 %v1157, %v1159
        %1161 = vadd.xlane.f32.xlu0 %v1160
        %v1162 = vpop.xlane.xlu0 %1161
        %v1163 = vmul.f32 %v1154, %v1154
        %v1164 = vmul.f32 %v1155, %v1155
        %v1165 = vmul.f32 %v1156, %v1156
        %v1166 = vadd.f32 %v1163, %v1164
        %v1167 = vsel %vm1158, %v1165, 0.0
        %v1168 = vadd.f32 %v1166, %v1167
        %1169 = vadd.xlane.f32.xlu0 %v1168
        %v1170 = vpop.xlane.xlu0 %1169
        %v1171 = vmul.f32 %v1162, 0.00390625
        %v1172 = vmul.f32 %v1170, 0.00390625
        %v1173 = vmul.f32 %v1171, %v1171
        %v1174 = vsub.f32 %v1172, %v1173
        %v1175 = vmax.f32 %v1174, 0.0
        %v1176 = vsub.f32 %v1135, %v1171
        %v1177 = vsub.f32 %v1136, %v1171
        %v1178 = vsub.f32 %v1137, %v1171
        %v1179 = vadd.f32 %v1175, 1e-05
        %v1180 = vrsqrt.pop %v1179
        %v1181 = vmul.f32 %v1176, %v1180
        %v1182 = vmul.f32 %v1177, %v1180
        %v1183 = vmul.f32 %v1178, %v1180
        %vm1184 = vcmp.gt.f32.partialorder %v1181, 0.0
        %vm1185 = vcmp.gt.f32.partialorder %v1182, 0.0
        %vm1186 = vcmp.gt.f32.partialorder %v1183, 0.0
        %v1187 = vmul.f32 %v1181, 0.01
        %v1188 = vmul.f32 %v1182, 0.01
        %v1189 = vmul.f32 %v1183, 0.01
        %v1190 = vsel %vm1184, %v1181, %v1187
        %v1191 = vsel %vm1185, %v1182, %v1188
        %v1192 = vsel %vm1186, %v1183, %v1189
        %1193 = vst [vmem:[%s163] sm:$0xff] %v1190
        %1194 = vst [vmem:[%s163 + $0x8] sm:$0xff] %v1191
        %1195 = vst.msk [vmem:[%s163 + $0x10] sm:$0xff] %vm1158, %v1192
        %s1196 = sand.u32 %s93, 1
        %s1197 = scalar_lea.sflag [#allocation3], %s1196
        %s1198 = sand.u32 %s93, 1
        %s1199 = smul.addr %s1198, 24
        %s1200 = scalar_lea.vmem [#allocation2], %s1199
        // Predicated region
        $region33: #{tpu_custom_call.1} parent=31 // pred_check
          %p1201 = pneg %p103
        $region34: #{tpu_custom_call.1} parent=31 // pred_check_branch
          %1203 = sbr.rel (%p1201) target = $region36
        $region35: #{tpu_custom_call.1} parent=31 // pred_region
          %s1205 = ssub.s32 384, 384
          %1206 = vsyncadd %s1197, %s1205
          %s1207 = smul.addr %s17, 3
          %s1208 = smul.addr %s1207, 128
          %s1209 = scalar_lea.hbm %s3, %s1208
          %s1211 = sshll.u32 %s1200, 4
          %s1212 = int_to_ptr.vmem [resolvable:$true] %s1211
          %1214 = dma.vmem_to_hbm [thread:$0]  %s1212, 384, %s1209, %s1197
        $region36: #{tpu_custom_call.1} parent=31 // pred_fallthru
          _
      $region32: #{tpu_custom_call.1} parent=5 // pred_fallthru
        _
      %p1215 = scmp.le.s32.totalorder 2, %s12
      // Predicated region
      $region37: #{tpu_custom_call.1} parent=5 // pred_check
        %p1216 = pneg %p1215
      $region38: #{tpu_custom_call.1} parent=5 // pred_check_branch
        %1218 = sbr.rel (%p1216) target = $region40
      $region39: #{tpu_custom_call.1} parent=5 // pred_region
        %s1219 = ssub.s32 %s12, 2
        // Predicated region
        $region41: #{tpu_custom_call.1} parent=39 // pred_check
          %p1220 = pneg %p109
        $region42: #{tpu_custom_call.1} parent=39 // pred_check_branch
          %1222 = sbr.rel (%p1220) target = $region44
        $region43: #{tpu_custom_call.1} parent=39 // pred_region
          %s1223 = sand.u32 %s94, 1
          %s1224 = scalar_lea.sflag [#allocation3], %s1223
          %s1225 = sand.u32 %s94, 1
          %s1226 = smul.addr %s1225, 24
          %s1227 = scalar_lea.vmem [#allocation2], %s1226
          %1228 = dma.done %s1224, 384
        $region44: #{tpu_custom_call.1} parent=39 // pred_fallthru
          _
      $region40: #{tpu_custom_call.1} parent=5 // pred_fallthru
        _
    $region6: #{tpu_custom_call.1} parent=1 // loop_footer
      %s16 = sadd.s32 1, %s12
    $region7: #{tpu_custom_call.1} parent=1 // loop_footer_branch
      %11 = sbr.rel target = $region3
    $region8: #{tpu_custom_call.1} parent=1 // loop_exit
      _
    %1229 = vsyncpa [#allocation3], 1
    %s1230 = scalar_lea.sflag [#allocation3], 1
    %1231 = vsyncpa %s1230, 1

</llo_original>
